<compile_context>
chip_gen: v7x
topology: tpu7x:2x2x1
jax: 0.10.0
libtpu: 0.0.40
codegen_flags: <defaults>
</compile_context>

<pallas_src>
import functools

import jax
import jax.numpy as jnp
from jax.experimental import pallas as pl
from jax.experimental.pallas import tpu as pltpu


def _round_up(x, m):
    return (x + m - 1) // m * m


def _weighted_logp(yp_ref, y_ref, *, beta, row0, n_rows, mask_rows):
    """w * yp with w = beta*onehot(y) + (1-beta)*exp(yp); rows >= n_rows zeroed."""
    yp = yp_ref[...].astype(jnp.float32)                      # (T, C) log-probs
    y = y_ref[...]                                            # (T, 1) int32 labels
    tn, c = yp.shape
    if mask_rows:
        row = jax.lax.broadcasted_iota(jnp.int32, (tn, 1), 0)
        yp = jnp.where(row0 + row < n_rows, yp, 0.0)          # masked rows -> w*0 = 0
    col = jax.lax.broadcasted_iota(jnp.int32, (tn, c), 1)
    w = (1.0 - beta) * jnp.exp(yp)                            # EUP
    w = jnp.where(col == y, w + beta, w)                      # add NLL weight on label
    return w * yp                                             # (T, C)


def _reduce_kernel(yp_ref, y_ref, out_ref, *, beta, n_rows, row_tile,
                   tiles_per_partial, mask_rows):
    p = pl.program_id(0)   # partial-sum (TensorCore) index   -- "parallel"
    t = pl.program_id(1)   # row-tile index within partial    -- "arbitrary"

    @pl.when(t == 0)
    def _():
        out_ref[...] = jnp.zeros_like(out_ref)

    # NOTE: row0 uses the UNCLAMPED logical tile index so a clamped/duplicated tail
    # tile (odd tile count split over 2 partials) is fully masked to zero.
    row0 = (p * tiles_per_partial + t) * row_tile
    wyp = _weighted_logp(yp_ref, y_ref, beta=beta, row0=row0,
                         n_rows=n_rows, mask_rows=mask_rows)
    # Per-class partial sums into the lane-dense output-resident accumulator.
    out_ref[...] += jnp.sum(wyp, axis=0, keepdims=True)[None]   # (1, 1, C)


def _noreduce_kernel(yp_ref, y_ref, out_ref, *, beta, n_rows, row_tile, mask_rows):
    i = pl.program_id(0)
    wyp = _weighted_logp(yp_ref, y_ref, beta=beta, row0=i * row_tile,
                         n_rows=n_rows, mask_rows=mask_rows)
    # Transpose so the sample axis lands on lanes; the sublane reduction then yields
    # a lane-dense (1, row_tile) result -> one lane-major store per tile instead of
    # row_tile/8 sublane-masked column stores.
    out_ref[...] = -jnp.sum(wyp.T, axis=0, keepdims=True)[None]  # (1, 1, T)


def soft_bootstrapping_loss(y_pred, y, *, beta=0.95, reduce=True,
                            as_pseudo_label=True, row_tile=None):
    """Pallas TPU forward pass of SoftBootstrappingLoss.

    y_pred: (N, C) float log-probabilities (float32 or bfloat16).
    y:      (N,)   integer class labels in [0, C).
    Returns a scalar if reduce=True, else per-sample losses of shape (N,) float32.
    """
    # TODO(synk): as_pseudo_label only changes gradients (detach); forward identical.
    del as_pseudo_label
    n, c = y_pred.shape
    beta = float(beta)
    y2d = y.astype(jnp.int32).reshape(n, 1)

    itemsize = jnp.dtype(y_pred.dtype).itemsize
    gran = max(8, 32 // max(1, itemsize))        # 8 rows for f32, 16 for bf16
    n_g = _round_up(n, gran)

    # Row-tile sizing: HBM-bound, so target ~1 MiB y_pred blocks per buffer; cap at
    # 1024 rows so double-buffered tiles stay small on v7x's 64 MiB VMEM.
    if row_tile is None:
        target_bytes = 1 << 20
        row_tile = max(gran, min(1024, (target_bytes // (c * itemsize)) // gran * gran,
                                 n_g))
    row_tile = int(row_tile)
    assert row_tile % 8 == 0, "row_tile must be a multiple of 8"

    n_tiles = pl.cdiv(n_g, row_tile)
    vmem_limit = 32 * 1024 * 1024

    if reduce:
        num_partials = 2 if n_tiles >= 2 else 1   # feed both TensorCores on v7x
        tiles_per_partial = pl.cdiv(n_tiles, num_partials)
        covered = row_tile * tiles_per_partial * num_partials
        mask_rows = covered != n
        max_tile = n_tiles - 1

        def in_map(p, t):
            # Clamp: with an odd tile split the last logical tile may lie past the
            # data; its rows are masked to zero contribution inside the kernel.
            return (jnp.minimum(p * tiles_per_partial + t, max_tile), 0)

        kernel = functools.partial(
            _reduce_kernel, beta=beta, n_rows=n, row_tile=row_tile,
            tiles_per_partial=tiles_per_partial, mask_rows=mask_rows)

        partials = pl.pallas_call(
            kernel,
            out_shape=jax.ShapeDtypeStruct((num_partials, 1, c), jnp.float32),
            grid_spec=pltpu.PrefetchScalarGridSpec(
                num_scalar_prefetch=0,
                grid=(num_partials, tiles_per_partial),
                in_specs=[
                    pl.BlockSpec((row_tile, c), in_map),
                    pl.BlockSpec((row_tile, 1), in_map),
                ],
                out_specs=pl.BlockSpec((1, 1, c), lambda p, t: (p, 0, 0)),
            ),
            compiler_params=pltpu.CompilerParams(
                dimension_semantics=("parallel", "arbitrary"),
                vmem_limit_bytes=vmem_limit),
        )(y_pred, y2d)
        return -jnp.sum(partials) / jnp.float32(n)
    else:
        covered = row_tile * n_tiles
        mask_rows = covered != n
        kernel = functools.partial(
            _noreduce_kernel, beta=beta, n_rows=n, row_tile=row_tile,
            mask_rows=mask_rows)
        out = pl.pallas_call(
            kernel,
            out_shape=jax.ShapeDtypeStruct((n_tiles, 1, row_tile), jnp.float32),
            grid_spec=pltpu.PrefetchScalarGridSpec(
                num_scalar_prefetch=0,
                grid=(n_tiles,),
                in_specs=[
                    pl.BlockSpec((row_tile, c), lambda i: (i, 0)),
                    pl.BlockSpec((row_tile, 1), lambda i: (i, 0)),
                ],
                out_specs=pl.BlockSpec((1, 1, row_tile), lambda i: (i, 0, 0)),
            ),
            compiler_params=pltpu.CompilerParams(
                dimension_semantics=("parallel",),
                vmem_limit_bytes=vmem_limit),
        )(y_pred, y2d)
        return out.reshape(-1)[:n]


def _reference(y_pred, y, beta=0.95, reduce=True):
    nll = -jnp.take_along_axis(y_pred, y[:, None].astype(jnp.int32), axis=1)[:, 0]
    boot = -(1.0 - beta) * jnp.sum(jnp.exp(y_pred) * y_pred, axis=1)
    out = beta * nll + boot
    return jnp.mean(out) if reduce else out


if __name__ == "__main__":
    key = jax.random.PRNGKey(0)
    k1, k2, k3, k4 = jax.random.split(key, 4)

    # Small shapes consistent with the module: a batch of log-softmax class scores.
    N, C = 16, 32
    y_pred = jax.nn.log_softmax(jax.random.normal(k1, (N, C), jnp.float32), axis=-1)
    y = jax.random.randint(k2, (N,), 0, C, dtype=jnp.int32)

    loss = jax.block_until_ready(
        soft_bootstrapping_loss(y_pred, y, beta=0.95, reduce=True))
    per = jax.block_until_ready(
        soft_bootstrapping_loss(y_pred, y, beta=0.95, reduce=False))
    assert jnp.allclose(loss, _reference(y_pred, y, 0.95, True), atol=1e-5, rtol=1e-5)
    assert jnp.allclose(per, _reference(y_pred, y, 0.95, False), atol=1e-5, rtol=1e-5)

    # Multi-tile accumulation, two-partial (dual-TensorCore) split and ragged-tail
    # row masking with a forced small tile (N=40 not a multiple of row_tile=16).
    N2, C2 = 40, 32
    y_pred2 = jax.nn.log_softmax(jax.random.normal(k3, (N2, C2), jnp.float32), axis=-1)
    y2 = jax.random.randint(k4, (N2,), 0, C2, dtype=jnp.int32)
    loss2 = jax.block_until_ready(
        soft_bootstrapping_loss(y_pred2, y2, beta=0.8, reduce=True, row_tile=16))
    per2 = jax.block_until_ready(
        soft_bootstrapping_loss(y_pred2, y2, beta=0.8, reduce=False, row_tile=16))
    assert jnp.allclose(loss2, _reference(y_pred2, y2, 0.8, True), atol=1e-5, rtol=1e-5)
    assert jnp.allclose(per2, _reference(y_pred2, y2, 0.8, False), atol=1e-5, rtol=1e-5)

    # bfloat16 log-probs: kernel upcasts in-VMEM; compare against f32 upcast ref.
    y_pred_bf = y_pred.astype(jnp.bfloat16)
    loss_bf = jax.block_until_ready(
        soft_bootstrapping_loss(y_pred_bf, y, beta=0.95, reduce=True))
    ref_bf = _reference(y_pred_bf.astype(jnp.float32), y, 0.95, True)
    assert jnp.allclose(loss_bf, ref_bf, atol=1e-5, rtol=1e-5)

    print("KERNEL_OK")
</pallas_src>

<mosaic_0001>
module attributes {stable_mosaic.version = 11 : i64} {
  func.func @_reduce_kernel(%arg0: i32, %arg1: i32, %arg2: memref<16x32xf32, #tpu.memory_space<vmem>>, %arg3: memref<16x1xi32, #tpu.memory_space<vmem>>, %arg4: memref<1x1x32xf32, #tpu.memory_space<vmem>>) attributes {dimension_semantics = [#tpu.dimension_semantics<parallel>, #tpu.dimension_semantics<arbitrary>], iteration_bounds = array<i64: 1, 1>, scalar_prefetch = 0 : i64, scratch_operands = 0 : i64, tpu.core_type = #tpu.core_type<tc>, window_params = [{transform_indices = @transform_0, window_bounds = array<i64: 16, 32>}, {transform_indices = @transform_1, window_bounds = array<i64: 16, 1>}, {transform_indices = @transform_2, window_bounds = array<i64: 1, 1, 32>}]} {
    %c0_i32 = arith.constant 0 : i32
    %0 = arith.cmpi eq, %arg1, %c0_i32 : i32
    %1 = arith.extui %0 : i1 to i32
    %c0_i32_0 = arith.constant 0 : i32
    %2 = arith.cmpi ne, %1, %c0_i32_0 : i32
    scf.if %2 {
      %cst_12 = arith.constant 0.000000e+00 : f32
      %21 = vector.broadcast %cst_12 : f32 to vector<1x1x32xf32>
      %c0_13 = arith.constant 0 : index
      %c0_14 = arith.constant 0 : index
      %c0_15 = arith.constant 0 : index
      %22 = vector.load %arg4[%c0_13, %c0_14, %c0_15] : memref<1x1x32xf32, #tpu.memory_space<vmem>>, vector<1x1x32xf32>
      tpu.vector_store %arg4[%c0_13, %c0_14, %c0_15], %21 {strides = array<i32>} : memref<1x1x32xf32, #tpu.memory_space<vmem>>, vector<1x1x32xf32>,
    } else {
    }
    %c0 = arith.constant 0 : index
    %c0_1 = arith.constant 0 : index
    %3 = vector.load %arg2[%c0, %c0_1] : memref<16x32xf32, #tpu.memory_space<vmem>>, vector<16x32xf32>
    %c0_2 = arith.constant 0 : index
    %c0_3 = arith.constant 0 : index
    %4 = vector.load %arg3[%c0_2, %c0_3] : memref<16x1xi32, #tpu.memory_space<vmem>>, vector<16x1xi32>
    %5 = tpu.iota {dimensions = array<i32: 1>} : vector<16x32xi32>
    %6 = math.exp %3 : vector<16x32xf32>
    %cst = arith.constant 5.000000e-02 : f32
    %7 = vector.broadcast %cst : f32 to vector<16x32xf32>
    %8 = arith.mulf %7, %6 : vector<16x32xf32>
    %9 = vector.broadcast %4 : vector<16x1xi32> to vector<16x32xi32>
    %10 = arith.cmpi eq, %5, %9 : vector<16x32xi32>
    %cst_4 = arith.constant 0.949999988 : f32
    %11 = vector.broadcast %cst_4 : f32 to vector<16x32xf32>
    %12 = arith.addf %8, %11 : vector<16x32xf32>
    %13 = arith.select %10, %12, %8 : vector<16x32xi1>, vector<16x32xf32>
    %14 = arith.mulf %13, %3 : vector<16x32xf32>
    %c0_5 = arith.constant 0 : index
    %c0_6 = arith.constant 0 : index
    %c0_7 = arith.constant 0 : index
    %15 = vector.load %arg4[%c0_5, %c0_6, %c0_7] : memref<1x1x32xf32, #tpu.memory_space<vmem>>, vector<1x1x32xf32>
    %cst_8 = arith.constant dense<0.000000e+00> : vector<32xf32>
    %16 = vector.multi_reduction <add>, %14, %cst_8 [0] : vector<16x32xf32> to vector<32xf32>
    %17 = vector.shape_cast %16 : vector<32xf32> to vector<1x32xf32>
    %18 = vector.shape_cast %17 : vector<1x32xf32> to vector<1x1x32xf32>
    %19 = arith.addf %15, %18 : vector<1x1x32xf32>
    %c0_9 = arith.constant 0 : index
    %c0_10 = arith.constant 0 : index
    %c0_11 = arith.constant 0 : index
    %20 = vector.load %arg4[%c0_9, %c0_10, %c0_11] : memref<1x1x32xf32, #tpu.memory_space<vmem>>, vector<1x1x32xf32>
    tpu.vector_store %arg4[%c0_9, %c0_10, %c0_11], %19 {strides = array<i32>} : memref<1x1x32xf32, #tpu.memory_space<vmem>>, vector<1x1x32xf32>,
    return
  }
  func.func @transform_0(%arg0: i32, %arg1: i32) -> (i32, i32) {
    %c1_i32 = arith.constant 1 : i32
    %0 = arith.muli %arg0, %c1_i32 : i32
    %1 = arith.addi %0, %arg1 : i32
    %c0_i32 = arith.constant 0 : i32
    %2 = arith.minsi %1, %c0_i32 : i32
    %c0_i32_0 = arith.constant 0 : i32
    %c0_i32_1 = arith.constant 0 : i32
    return %2, %c0_i32_0 : i32, i32
  }
  func.func @transform_1(%arg0: i32, %arg1: i32) -> (i32, i32) {
    %c1_i32 = arith.constant 1 : i32
    %0 = arith.muli %arg0, %c1_i32 : i32
    %1 = arith.addi %0, %arg1 : i32
    %c0_i32 = arith.constant 0 : i32
    %2 = arith.minsi %1, %c0_i32 : i32
    %c0_i32_0 = arith.constant 0 : i32
    %c0_i32_1 = arith.constant 0 : i32
    return %2, %c0_i32_0 : i32, i32
  }
  func.func @transform_2(%arg0: i32, %arg1: i32) -> (i32, i32, i32) {
    %c0_i32 = arith.constant 0 : i32
    %c0_i32_0 = arith.constant 0 : i32
    %c0_i32_1 = arith.constant 0 : i32
    return %arg0, %c0_i32, %c0_i32_0 : i32, i32, i32
  }
}

</mosaic_0001>

<llo_original>
// kernel: tpu_custom_call.1
$region0: #{tpu_custom_call.1}
  #allocation0 [shape = 'u32[]', space=smem, size = 0x4, offset = 0x4, fixed_abs, tag = 'smem constant byte address 0x4 - core index']
  #allocation1 [shape = 'u32[144,128]{1,0:T(1,128)}', space=vmem, size = 0x12000, scoped, tag = 'internal scratch']
  %s0 = inlined_call_operand.vmem [shape: f32[16,32], index: 0, kind: input, shape index: {}]
  %s1 = inlined_call_operand.vmem [shape: s32[16,1], index: 1, kind: input, shape index: {}]
  %s2 = inlined_call_operand.hbm [shape: f32[1,1,32], index: 2, kind: output, shape index: {}]
  %s3 = sld [smem:[#allocation0]]
  $region22: #{tpu_custom_call.1} parent=0
    _
  %s5 = ssub.s32 1, %s3
  %s6 = scalar_select 0, %s5, %s3
  $region1: #{tpu_custom_call.1} parent=0
    #allocation2 [shape = 'u8[512]{0}', space=vmem, size = 0x400, scoped, tag = 'output window, operand 0, single buffered']
    #allocation3 [shape = 's32[1]{0}', space=sflag, size = 0x4, scoped, tag = 'scoped memory for tpu_custom_call.1']
    %7 = vsyncpa [#allocation3], 0
    // Predicated region
    $region2: #{tpu_custom_call.1} parent=1 // pred_check
      _
    $region3: #{tpu_custom_call.1} parent=1 // pred_check_branch
      %9 = sbr.rel (0) target = $region5
    $region4: #{tpu_custom_call.1} parent=1 // pred_region
      %s10 = sadd.s32 0, 0
      %p11 = scmp.lt.s32.totalorder %s10, 0
      %s12 = scalar_select %p11, %s10, 0
      %s13 = smul.u32 2, %s12
      %p14 = scmp.lt.s32.totalorder %s13, 1
      %s15 = scalar_select %p14, %s13, 1
      %s16 = smul.addr %s15, 8
      %s17 = scalar_lea.vmem %s0, %s16
      %s18 = sadd.s32 0, 0
      %p19 = scmp.lt.s32.totalorder %s18, 0
      %s20 = scalar_select %p19, %s18, 0
      %s21 = smul.u32 2, %s20
    $region5: #{tpu_custom_call.1} parent=1 // pred_fallthru
      _
    // Predicated region
    $region6: #{tpu_custom_call.1} parent=1 // pred_check
      _
    $region7: #{tpu_custom_call.1} parent=1 // pred_check_branch
      %23 = sbr.rel (0) target = $region9
    $region8: #{tpu_custom_call.1} parent=1 // pred_region
      %s24 = sadd.s32 0, 0
      %p25 = scmp.lt.s32.totalorder %s24, 0
      %s26 = scalar_select %p25, %s24, 0
      %s27 = smul.u32 2, %s26
      %p28 = scmp.lt.s32.totalorder %s27, 1
      %s29 = scalar_select %p28, %s27, 1
      %s30 = smul.addr %s29, 8
      %s31 = scalar_lea.vmem %s1, %s30
      %s32 = sadd.s32 0, 0
      %p33 = scmp.lt.s32.totalorder %s32, 0
      %s34 = scalar_select %p33, %s32, 0
      %s35 = smul.u32 2, %s34
    $region9: #{tpu_custom_call.1} parent=1 // pred_fallthru
      _
    %s36 = sadd.s32 0, 0
    %p37 = scmp.lt.s32.totalorder %s36, 0
    %s38 = scalar_select %p37, %s36, 0
    %s39 = smul.u32 2, %s38
    %p40 = scmp.lt.s32.totalorder %s39, 1
    %s41 = scalar_select %p40, %s39, 1
    %s42 = smul.addr %s41, 8
    %s43 = scalar_lea.vmem %s0, %s42
    %s44 = sadd.s32 0, 0
    %p45 = scmp.lt.s32.totalorder %s44, 0
    %s46 = scalar_select %p45, %s44, 0
    %s47 = smul.u32 2, %s46
    %p48 = scmp.lt.s32.totalorder %s47, 1
    %s49 = scalar_select %p48, %s47, 1
    %s50 = smul.addr %s49, 8
    %s51 = scalar_lea.vmem %s1, %s50
    %s52 = sadd.s32 0, 0
    %p53 = scmp.lt.s32.totalorder %s52, 0
    %s54 = scalar_select %p53, %s52, 0
    %s55 = smul.u32 2, %s54
    %p56 = scmp.lt.s32.totalorder %s55, 1
    %s57 = scalar_select %p56, %s55, 1
    %s58 = smul.addr %s57, 8
    %s59 = scalar_lea.vmem %s0, %s58
    %s60 = sadd.s32 0, 0
    %p61 = scmp.lt.s32.totalorder %s60, 0
    %s62 = scalar_select %p61, %s60, 0
    %s63 = smul.u32 2, %s62
    %s64 = sadd.s32 0, 0
    %p65 = scmp.lt.s32.totalorder %s64, 0
    %s66 = scalar_select %p65, %s64, 0
    %s67 = smul.u32 2, %s66
    %p68 = scmp.lt.s32.totalorder %s67, 1
    %s69 = scalar_select %p68, %s67, 1
    %s70 = smul.addr %s69, 8
    %s71 = scalar_lea.vmem %s1, %s70
    %s72 = sadd.s32 0, 0
    %p73 = scmp.lt.s32.totalorder %s72, 0
    %s74 = scalar_select %p73, %s72, 0
    %s75 = smul.u32 2, %s74
    %p76 = scmp.eq.s32.totalorder 0, 0
    // Predicated region
    $region10: #{tpu_custom_call.1} parent=1 // pred_check
      %p77 = pneg %p76
    $region11: #{tpu_custom_call.1} parent=1 // pred_check_branch
      %79 = sbr.rel (%p77) target = $region13
    $region12: #{tpu_custom_call.1} parent=1 // pred_region
      %vm80 = vcmask 253952
      %81 = vst.msk [vmem:[#allocation2] sm:$0x1] %vm80, 0.0
    $region13: #{tpu_custom_call.1} parent=1 // pred_fallthru
      _
    %v82 = vld [vmem:[%s59] sm:$0xff]
    %v83 = vld [vmem:[%s59 + $0x8] sm:$0xff]
    %v84 = vld [vmem:[%s71] sm:$0xff]
    %v85 = vld [vmem:[%s71 + $0x8] sm:$0xff]
    %v86 = vlaneseq
    %v87 = vand.u32 %v86, 127
    %v88 = vmul.f32 %v82, 1.442695
    %v89 = vpow.pop %v88
    %v90 = vmul.f32 %v83, 1.442695
    %v91 = vpow.pop %v90
    %v92 = vmul.f32 %v89, 0.05
    %v93 = vmul.f32 %v91, 0.05
    %94 = vset.pattern.permute.xlu0 0
    %95 = vperm.xlu0 %94, %v84
    %v96 = vpop.permute.xlu0 %95
    %97 = vset.pattern.permute.xlu0 0
    %98 = vperm.xlu0 %97, %v85
    %v99 = vpop.permute.xlu0 %98
    %vm100 = vcmp.eq.s32.totalorder %v87, %v96
    %vm101 = vcmp.eq.s32.totalorder %v87, %v99
    %v102 = vadd.f32 %v92, 0.95
    %v103 = vadd.f32 %v93, 0.95
    %v104 = vsel %vm100, %v102, %v92
    %v105 = vsel %vm101, %v103, %v93
    %v106 = vmul.f32 %v104, %v82
    %v107 = vmul.f32 %v105, %v83
    %v108 = vld [vmem:[#allocation2] sm:$0x1]
    %vm109 = vcmask 261120
    %v110 = vsel %vm109, %v106, 0.0
    %v111 = vsel %vm109, %v107, 0.0
    %v112 = vadd.f32 %v110, %v111
    %v113 = vrot.slane %v112, 4
    %v114 = vadd.f32 %v112, %v113
    %v115 = vrot.slane %v114, 2
    %v116 = vadd.f32 %v114, %v115
    %v117 = vrot.slane %v116, 1
    %v118 = vadd.f32 %v116, %v117
    %v119 = vadd.f32 %v108, %v118
    %vm120 = vcmask 253952
    %121 = vst.msk [vmem:[#allocation2] sm:$0x1] %vm120, %v119
    // Predicated region
    $region14: #{tpu_custom_call.1} parent=1 // pred_check
      _
    $region15: #{tpu_custom_call.1} parent=1 // pred_check_branch
      %123 = sbr.rel (0) target = $region17
    $region16: #{tpu_custom_call.1} parent=1 // pred_region
      %s125 = ssub.s32 16, 16
      %126 = vsyncadd [#allocation3], %s125
      %s128 = sshll.u32 [#allocation2], 4
      %s129 = int_to_ptr.vmem [resolvable:$true] %s128
      %131 = dma.vmem_to_hbm [thread:$0]  %s129, 16, %s2, [#allocation3]
    $region17: #{tpu_custom_call.1} parent=1 // pred_fallthru
      _
    // Predicated region
    $region18: #{tpu_custom_call.1} parent=1 // pred_check
      _
    $region19: #{tpu_custom_call.1} parent=1 // pred_check_branch
      %133 = sbr.rel (0) target = $region21
    $region20: #{tpu_custom_call.1} parent=1 // pred_region
      %134 = dma.done [#allocation3], 16
    $region21: #{tpu_custom_call.1} parent=1 // pred_fallthru
      _
    %135 = vsyncpa [#allocation3], 1

</llo_original>
